<compile_context>
chip_gen: v7x
topology: tpu7x:2x2x1
jax: 0.10.0
libtpu: 0.0.40
codegen_flags: <defaults>
</compile_context>

<pallas_src>
import jax
import jax.numpy as jnp
from jax.experimental import pallas as pl
from jax.experimental.pallas import tpu as pltpu


def se_kernel(x_ref, w1_ref, b1_ref, w2_ref, b2_ref, o_ref):
    # x_ref : (1, C, TL)    w1_ref: (C, S)   b1_ref: (S, 1)
    # w2_ref: (C, S)        b2_ref: (C, 1)   o_ref : (1, C, TL)
    x = x_ref[0]                                    # (C, TL)
    x32 = x.astype(jnp.float32)                     # compute in f32 (bf16-I/O friendly)
    w1 = w1_ref[...].astype(jnp.float32)            # (C, S)
    b1 = b1_ref[...].astype(jnp.float32)            # (S, 1)
    w2 = w2_ref[...].astype(jnp.float32)            # (C, S)
    b2 = b2_ref[...].astype(jnp.float32)            # (C, 1)

    S = w1.shape[1]
    # y_pre[c, l] = b2[c] + sum_s w2[c, s] * swish(b1[s] + sum_c' w1[c', s] * x[c', l])
    y_pre = jnp.zeros(x32.shape, jnp.float32)
    for s in range(S):                              # S is tiny & static -> fully unrolled
        # squeeze: VPU multiply + cross-sublane reduce (no MXU for a 1-wide contraction)
        h = jnp.sum(x32 * w1[:, s:s + 1], axis=0, keepdims=True) + b1[s:s + 1, :]  # (1, TL)
        h = h * jax.nn.sigmoid(h)                   # Swish (sigmoid runs on the EUP)
        # expand: broadcast along channels
        y_pre = y_pre + w2[:, s:s + 1] * h          # (C, TL)
    gate = jax.nn.sigmoid(y_pre + b2)               # (C, TL)
    o_ref[0] = (x32 * gate).astype(o_ref.dtype)


def _pick_l_tile(L, C, itemsize, budget_bytes=4 << 20):
    """Largest lane-dense (multiple-of-128) tile that divides L within a VMEM budget."""
    if L % 128 != 0:
        return L                                    # one block over the whole L axis
    for tl in (4096, 2048, 1024, 512, 256, 128):
        if tl <= L and L % tl == 0 and C * tl * itemsize <= budget_bytes:
            return tl
    return 128


def se_forward(x, w1, b1, w2, b2):
    """x: [N, C, L]. w1: [S, C] (torch Conv1d weight with k squeezed), b1: [S],
       w2: [C, S], b2: [C].  Returns [N, C, L]."""
    N, C, L = x.shape
    S = w1.shape[0]
    tl = _pick_l_tile(L, C, x.dtype.itemsize)
    assert L % tl == 0

    w1_k = jnp.asarray(w1).T.reshape(C, S)          # (C, S)
    b1_k = jnp.asarray(b1).reshape(S, 1)            # (S, 1)
    w2_k = jnp.asarray(w2).reshape(C, S)            # (C, S)
    b2_k = jnp.asarray(b2).reshape(C, 1)            # (C, 1)

    M = N * L
    cost = pl.CostEstimate(
        flops=int(M * (4 * C * S + 3 * S + 3 * C + 1)),
        transcendentals=int(M * (S + C)),
        bytes_accessed=int(2 * M * C * x.dtype.itemsize + (2 * C * S + S + C) * 4),
    )

    return pl.pallas_call(
        se_kernel,
        out_shape=jax.ShapeDtypeStruct((N, C, L), x.dtype),
        grid_spec=pltpu.PrefetchScalarGridSpec(
            num_scalar_prefetch=0,
            grid=(N, L // tl),
            in_specs=[
                pl.BlockSpec((1, C, tl), lambda n, l: (n, 0, l)),   # x tile (lane-dense L)
                pl.BlockSpec((C, S), lambda n, l: (0, 0)),          # reduce weight (resident)
                pl.BlockSpec((S, 1), lambda n, l: (0, 0)),          # reduce bias
                pl.BlockSpec((C, S), lambda n, l: (0, 0)),          # expand weight
                pl.BlockSpec((C, 1), lambda n, l: (0, 0)),          # expand bias
            ],
            out_specs=pl.BlockSpec((1, C, tl), lambda n, l: (n, 0, l)),
        ),
        compiler_params=pltpu.CompilerParams(
            dimension_semantics=("parallel", "parallel")),
        cost_estimate=cost,
    )(x, w1_k, b1_k, w2_k, b2_k)


def se_reference(x, w1, b1, w2, b2):
    """Pure-JAX reference of the same forward pass (NCL layout)."""
    h = jnp.einsum("sc,ncl->nsl", w1, x) + b1.reshape(1, -1, 1)
    h = h * jax.nn.sigmoid(h)
    y = jnp.einsum("cs,nsl->ncl", w2, h) + b2.reshape(1, -1, 1)
    y = jax.nn.sigmoid(y)
    return x * y


if __name__ == "__main__":
    # Module hyperparams (mirrors SE(channels=4, squeeze_channels=8, se_ratio=0.25)).
    channels = 4
    squeeze_channels_arg = 8
    se_ratio = 0.25
    S = int(min(int(squeeze_channels_arg * se_ratio), 1))   # as in the reference __init__ -> 1

    key = jax.random.PRNGKey(0)
    kx, kw1, kb1, kw2, kb2 = jax.random.split(key, 5)

    # Conv1d weights in torch layout (kernel dim squeezed).
    w1 = 0.1 * jax.random.normal(kw1, (S, channels), dtype=jnp.float32)   # se_reduce
    b1 = 0.1 * jax.random.normal(kb1, (S,), dtype=jnp.float32)
    w2 = 0.1 * jax.random.normal(kw2, (channels, S), dtype=jnp.float32)   # se_expand
    b2 = 0.1 * jax.random.normal(kb2, (channels,), dtype=jnp.float32)

    ok = True
    # Small canonical shape from the module, a lane-dense multi-tile case,
    # and a non-128-multiple case (whole-L block fallback).
    for (N, C, L) in [(2, channels, 16), (2, channels, 384), (1, channels, 200)]:
        x = jax.random.normal(kx, (N, C, L), dtype=jnp.float32)
        out = se_forward(x, w1, b1, w2, b2)
        out = jax.block_until_ready(out)
        ref = se_reference(x, w1, b1, w2, b2)
        ok = ok and (out.shape == (N, C, L))
        ok = ok and bool(jnp.allclose(out, ref, atol=1e-5, rtol=1e-5))
        assert ok, f"mismatch at shape {(N, C, L)}"

    print("KERNEL_OK")
</pallas_src>

<mosaic_0001>
module attributes {stable_mosaic.version = 11 : i64} {
  func.func @se_kernel(%arg0: i32, %arg1: i32, %arg2: memref<1x4x16xf32, #tpu.memory_space<vmem>>, %arg3: memref<4x1xf32, #tpu.memory_space<vmem>>, %arg4: memref<1x1xf32, #tpu.memory_space<vmem>>, %arg5: memref<4x1xf32, #tpu.memory_space<vmem>>, %arg6: memref<4x1xf32, #tpu.memory_space<vmem>>, %arg7: memref<1x4x16xf32, #tpu.memory_space<vmem>>) attributes {dimension_semantics = [#tpu.dimension_semantics<parallel>, #tpu.dimension_semantics<parallel>], iteration_bounds = array<i64: 2, 1>, scalar_prefetch = 0 : i64, scratch_operands = 0 : i64, tpu.core_type = #tpu.core_type<tc>, window_params = [{transform_indices = @transform_0, window_bounds = array<i64: 1, 4, 16>}, {pipeline_mode = #tpu.pipeline_mode<synchronous>, transform_indices = @transform_1, window_bounds = array<i64: 4, 1>}, {pipeline_mode = #tpu.pipeline_mode<synchronous>, transform_indices = @transform_2, window_bounds = array<i64: 1, 1>}, {pipeline_mode = #tpu.pipeline_mode<synchronous>, transform_indices = @transform_3, window_bounds = array<i64: 4, 1>}, {pipeline_mode = #tpu.pipeline_mode<synchronous>, transform_indices = @transform_4, window_bounds = array<i64: 4, 1>}, {transform_indices = @transform_5, window_bounds = array<i64: 1, 4, 16>}]} {
    %c0 = arith.constant 0 : index
    %c0_0 = arith.constant 0 : index
    %c0_1 = arith.constant 0 : index
    %0 = vector.load %arg2[%c0, %c0_0, %c0_1] : memref<1x4x16xf32, #tpu.memory_space<vmem>>, vector<1x4x16xf32>
    %1 = vector.shape_cast %0 : vector<1x4x16xf32> to vector<4x16xf32>
    %c0_2 = arith.constant 0 : index
    %c0_3 = arith.constant 0 : index
    %2 = vector.load %arg3[%c0_2, %c0_3] : memref<4x1xf32, #tpu.memory_space<vmem>>, vector<4x1xf32>
    %c0_4 = arith.constant 0 : index
    %c0_5 = arith.constant 0 : index
    %3 = vector.load %arg4[%c0_4, %c0_5] : memref<1x1xf32, #tpu.memory_space<vmem>>, vector<1x1xf32>
    %c0_6 = arith.constant 0 : index
    %c0_7 = arith.constant 0 : index
    %4 = vector.load %arg5[%c0_6, %c0_7] : memref<4x1xf32, #tpu.memory_space<vmem>>, vector<4x1xf32>
    %c0_8 = arith.constant 0 : index
    %c0_9 = arith.constant 0 : index
    %5 = vector.load %arg6[%c0_8, %c0_9] : memref<4x1xf32, #tpu.memory_space<vmem>>, vector<4x1xf32>
    %cst = arith.constant 0.000000e+00 : f32
    %6 = vector.broadcast %cst : f32 to vector<4x16xf32>
    %7 = vector.broadcast %2 : vector<4x1xf32> to vector<4x16xf32>
    %8 = arith.mulf %1, %7 : vector<4x16xf32>
    %cst_10 = arith.constant dense<0.000000e+00> : vector<16xf32>
    %9 = vector.multi_reduction <add>, %8, %cst_10 [0] : vector<4x16xf32> to vector<16xf32>
    %10 = vector.shape_cast %9 : vector<16xf32> to vector<1x16xf32>
    %11 = vector.broadcast %3 : vector<1x1xf32> to vector<1x16xf32>
    %12 = arith.addf %10, %11 : vector<1x16xf32>
    %13 = arith.negf %12 : vector<1x16xf32>
    %14 = math.exp %13 : vector<1x16xf32>
    %cst_11 = arith.constant 1.000000e+00 : f32
    %15 = vector.broadcast %cst_11 : f32 to vector<1x16xf32>
    %16 = arith.addf %15, %14 : vector<1x16xf32>
    %17 = arith.divf %15, %16 : vector<1x16xf32>
    %18 = arith.mulf %12, %17 : vector<1x16xf32>
    %19 = vector.broadcast %4 : vector<4x1xf32> to vector<4x16xf32>
    %20 = vector.broadcast %18 : vector<1x16xf32> to vector<4x16xf32>
    %21 = arith.mulf %19, %20 : vector<4x16xf32>
    %22 = arith.addf %6, %21 : vector<4x16xf32>
    %23 = vector.broadcast %5 : vector<4x1xf32> to vector<4x16xf32>
    %24 = arith.addf %22, %23 : vector<4x16xf32>
    %25 = arith.negf %24 : vector<4x16xf32>
    %26 = math.exp %25 : vector<4x16xf32>
    %cst_12 = arith.constant 1.000000e+00 : f32
    %27 = vector.broadcast %cst_12 : f32 to vector<4x16xf32>
    %28 = arith.addf %27, %26 : vector<4x16xf32>
    %29 = arith.divf %27, %28 : vector<4x16xf32>
    %30 = arith.mulf %1, %29 : vector<4x16xf32>
    %c0_13 = arith.constant 0 : index
    %c0_14 = arith.constant 0 : index
    %c0_15 = arith.constant 0 : index
    %31 = vector.load %arg7[%c0_13, %c0_14, %c0_15] : memref<1x4x16xf32, #tpu.memory_space<vmem>>, vector<1x4x16xf32>
    %32 = vector.shape_cast %31 : vector<1x4x16xf32> to vector<4x16xf32>
    %33 = vector.shape_cast %30 : vector<4x16xf32> to vector<1x4x16xf32>
    tpu.vector_store %arg7[%c0_13, %c0_14, %c0_15], %33 {strides = array<i32>} : memref<1x4x16xf32, #tpu.memory_space<vmem>>, vector<1x4x16xf32>,
    return
  }
  func.func @transform_0(%arg0: i32, %arg1: i32) -> (i32, i32, i32) {
    %c0_i32 = arith.constant 0 : i32
    %c0_i32_0 = arith.constant 0 : i32
    return %arg0, %c0_i32, %arg1 : i32, i32, i32
  }
  func.func @transform_1(%arg0: i32, %arg1: i32) -> (i32, i32) {
    %c0_i32 = arith.constant 0 : i32
    %c0_i32_0 = arith.constant 0 : i32
    %c0_i32_1 = arith.constant 0 : i32
    return %c0_i32, %c0_i32_0 : i32, i32
  }
  func.func @transform_2(%arg0: i32, %arg1: i32) -> (i32, i32) {
    %c0_i32 = arith.constant 0 : i32
    %c0_i32_0 = arith.constant 0 : i32
    %c0_i32_1 = arith.constant 0 : i32
    return %c0_i32, %c0_i32_0 : i32, i32
  }
  func.func @transform_3(%arg0: i32, %arg1: i32) -> (i32, i32) {
    %c0_i32 = arith.constant 0 : i32
    %c0_i32_0 = arith.constant 0 : i32
    %c0_i32_1 = arith.constant 0 : i32
    return %c0_i32, %c0_i32_0 : i32, i32
  }
  func.func @transform_4(%arg0: i32, %arg1: i32) -> (i32, i32) {
    %c0_i32 = arith.constant 0 : i32
    %c0_i32_0 = arith.constant 0 : i32
    %c0_i32_1 = arith.constant 0 : i32
    return %c0_i32, %c0_i32_0 : i32, i32
  }
  func.func @transform_5(%arg0: i32, %arg1: i32) -> (i32, i32, i32) {
    %c0_i32 = arith.constant 0 : i32
    %c0_i32_0 = arith.constant 0 : i32
    return %arg0, %c0_i32, %arg1 : i32, i32, i32
  }
}

</mosaic_0001>

<llo_original>
// kernel: tpu_custom_call.1
$region0: #{tpu_custom_call.1}
  #allocation0 [shape = 'u32[]', space=smem, size = 0x4, offset = 0x4, fixed_abs, tag = 'smem constant byte address 0x4 - core index']
  #allocation1 [shape = 'u32[144,128]{1,0:T(1,128)}', space=vmem, size = 0x12000, scoped, tag = 'internal scratch']
  #allocation2 [shape = 'f32[1,1]{1,0:T(1,128)S(1)}', space=vmem, size = 0x200, scoped, tag = 'scoped memory for tpu_custom_call.1']
  %s0 = inlined_call_operand.vmem [shape: f32[2,4,16], index: 0, kind: input, shape index: {}]
  %s1 = inlined_call_operand.vmem [shape: f32[4,1], index: 1, kind: input, shape index: {}]
  %s2 = inlined_call_operand.<no memory space> [shape: f32[1,1], index: 2, kind: input, shape index: {}]
  %s3 = inlined_call_operand.vmem [shape: f32[4,1], index: 3, kind: input, shape index: {}]
  %s4 = inlined_call_operand.vmem [shape: f32[4,1], index: 4, kind: input, shape index: {}]
  %s5 = inlined_call_operand.hbm [shape: f32[2,4,16], index: 5, kind: output, shape index: {}]
  %s6 = sld [smem:[#allocation0]]
  $region53: #{tpu_custom_call.1} parent=0
    _
  %s8 = ssub.s32 1, %s6
  %s9 = scalar_select 0, %s8, %s6
  %v10 = vstv %s2
  %11 = vst [vmem:[#allocation2] sm:$0x1] %v10
  $region1: #{tpu_custom_call.1} parent=0
    #allocation3 [shape = 'u8[4096]{0}', space=vmem, size = 0x1000, scoped, tag = 'output window, operand 0']
    #allocation4 [shape = 's32[2]{0}', space=sflag, size = 0x8, scoped, tag = 'scoped memory for tpu_custom_call.1']
    %12 = vsyncpa [#allocation4], 0
    %s13 = scalar_lea.sflag [#allocation4], 1
    %14 = vsyncpa %s13, 0
    loop: start=0, step=1, limit=4
    $region2: #{tpu_custom_call.1} parent=1 // loop_pre_header
      _
    $region3: #{tpu_custom_call.1} parent=1 // loop_header
      %s16 = sphi 0, %s20
      %p17 = scmp.ge.s32.totalorder %s16, 4
      %s23 = sphi 0, %s35
      %s24 = sphi 0, %s31
      %s25 = sphi 0, %s23
      %s26 = sphi 0, %s24
      %s27 = sphi 0, %s25
      %s28 = sphi 0, %s26
      %s40 = sphi 0, %s42
      %s43 = sphi 0, %s40
      %s44 = sphi 0, %s43
      %s60 = sphi 0, %s44
      %s64 = sphi 0, %s64
      %s66 = sphi 0, %s64
      %s67 = sphi 0, %s66
      %s81 = sphi 0, %s67
      %s85 = sphi 0, %s85
      %s87 = sphi 0, %s85
      %s88 = sphi 0, %s87
      %s102 = sphi 0, %s88
      %s106 = sphi 0, %s106
      %s108 = sphi 0, %s106
      %s109 = sphi 0, %s108
      %s123 = sphi 0, %s109
      %s127 = sphi 0, %s127
      %s129 = sphi 0, %s127
      %s130 = sphi 0, %s129
      %s144 = sphi 0, %s130
      %s152 = sphi 0, %s154
      %s155 = sphi 0, %s152
      %s156 = sphi 0, %s155
      %s172 = sphi 0, %s156
    $region4: #{tpu_custom_call.1} parent=1 // loop_header_branch
      %19 = sbr.rel (%p17) target = $region8
    $region5: #{tpu_custom_call.1} parent=1 // loop_body
      %s21 = ssub.s32 %s16, 1
      %s22 = ssub.s32 %s16, 2
      %s29 = sadd.s32 1, %s24
      %p30 = scmp.ge.s32.totalorder %s29, 1
      %s31 = scalar_select %p30, 0, %s29
      %s32 = sadd.s32 1, %s23
      %s33 = scalar_select %p30, %s32, %s23
      %p34 = scmp.ge.s32.totalorder %s33, 2
      %s35 = scalar_select %p34, 0, %s33
      %s36 = ssub.s32 %s23, %s35
      %s37 = ssub.s32 %s24, %s31
      %s38 = sor.u32 %s36, %s37
      %p39 = scmp.eq.s32.totalorder %s38, 0
      %s41 = sadd.s32 %s40, 1
      %s42 = scalar_select %p39, %s40, %s41
      %p45 = pneg %p39
      %p46 = scmp.eq.s32.totalorder %s16, 1
      %p47 = por %p45, %p46
      %p48 = scmp.ne.s32.totalorder %s40, %s43
      %p49 = scmp.eq.s32.totalorder %s16, 0
      %p50 = por %p48, %p49
      %p51 = scmp.ne.s32.totalorder %s40, %s43
      %p52 = scmp.eq.s32.totalorder %s21, 1
      %p53 = por %p51, %p52
      %p54 = scmp.ne.s32.totalorder %s43, %s44
      %p55 = scmp.eq.s32.totalorder %s21, 0
      %p56 = por %p54, %p55
      %p57 = scmp.ne.s32.totalorder %s43, %s44
      %p58 = scmp.eq.s32.totalorder %s22, 1
      %p59 = por %p57, %p58
      %p61 = scmp.ne.s32.totalorder %s44, %s60
      %p62 = scmp.eq.s32.totalorder %s22, 0
      %p63 = por %p61, %p62
      %s65 = sadd.s32 %s64, 1
      %p68 = scmp.eq.s32.totalorder %s16, 1
      %p69 = scmp.ne.s32.totalorder %s64, %s66
      %p70 = scmp.eq.s32.totalorder %s16, 0
      %p71 = por %p69, %p70
      %p72 = scmp.ne.s32.totalorder %s64, %s66
      %p73 = scmp.eq.s32.totalorder %s21, 1
      %p74 = por %p72, %p73
      %p75 = scmp.ne.s32.totalorder %s66, %s67
      %p76 = scmp.eq.s32.totalorder %s21, 0
      %p77 = por %p75, %p76
      %p78 = scmp.ne.s32.totalorder %s66, %s67
      %p79 = scmp.eq.s32.totalorder %s22, 1
      %p80 = por %p78, %p79
      %p82 = scmp.ne.s32.totalorder %s67, %s81
      %p83 = scmp.eq.s32.totalorder %s22, 0
      %p84 = por %p82, %p83
      %s86 = sadd.s32 %s85, 1
      %p89 = scmp.eq.s32.totalorder %s16, 1
      %p90 = scmp.ne.s32.totalorder %s85, %s87
      %p91 = scmp.eq.s32.totalorder %s16, 0
      %p92 = por %p90, %p91
      %p93 = scmp.ne.s32.totalorder %s85, %s87
      %p94 = scmp.eq.s32.totalorder %s21, 1
      %p95 = por %p93, %p94
      %p96 = scmp.ne.s32.totalorder %s87, %s88
      %p97 = scmp.eq.s32.totalorder %s21, 0
      %p98 = por %p96, %p97
      %p99 = scmp.ne.s32.totalorder %s87, %s88
      %p100 = scmp.eq.s32.totalorder %s22, 1
      %p101 = por %p99, %p100
      %p103 = scmp.ne.s32.totalorder %s88, %s102
      %p104 = scmp.eq.s32.totalorder %s22, 0
      %p105 = por %p103, %p104
      %s107 = sadd.s32 %s106, 1
      %p110 = scmp.eq.s32.totalorder %s16, 1
      %p111 = scmp.ne.s32.totalorder %s106, %s108
      %p112 = scmp.eq.s32.totalorder %s16, 0
      %p113 = por %p111, %p112
      %p114 = scmp.ne.s32.totalorder %s106, %s108
      %p115 = scmp.eq.s32.totalorder %s21, 1
      %p116 = por %p114, %p115
      %p117 = scmp.ne.s32.totalorder %s108, %s109
      %p118 = scmp.eq.s32.totalorder %s21, 0
      %p119 = por %p117, %p118
      %p120 = scmp.ne.s32.totalorder %s108, %s109
      %p121 = scmp.eq.s32.totalorder %s22, 1
      %p122 = por %p120, %p121
      %p124 = scmp.ne.s32.totalorder %s109, %s123
      %p125 = scmp.eq.s32.totalorder %s22, 0
      %p126 = por %p124, %p125
      %s128 = sadd.s32 %s127, 1
      %p131 = scmp.eq.s32.totalorder %s16, 1
      %p132 = scmp.ne.s32.totalorder %s127, %s129
      %p133 = scmp.eq.s32.totalorder %s16, 0
      %p134 = por %p132, %p133
      %p135 = scmp.ne.s32.totalorder %s127, %s129
      %p136 = scmp.eq.s32.totalorder %s21, 1
      %p137 = por %p135, %p136
      %p138 = scmp.ne.s32.totalorder %s129, %s130
      %p139 = scmp.eq.s32.totalorder %s21, 0
      %p140 = por %p138, %p139
      %p141 = scmp.ne.s32.totalorder %s129, %s130
      %p142 = scmp.eq.s32.totalorder %s22, 1
      %p143 = por %p141, %p142
      %p145 = scmp.ne.s32.totalorder %s130, %s144
      %p146 = scmp.eq.s32.totalorder %s22, 0
      %p147 = por %p145, %p146
      %s148 = ssub.s32 %s23, %s35
      %s149 = ssub.s32 %s24, %s31
      %s150 = sor.u32 %s148, %s149
      %p151 = scmp.eq.s32.totalorder %s150, 0
      %s153 = sadd.s32 %s152, 1
      %s154 = scalar_select %p151, %s152, %s153
      %p157 = pneg %p151
      %p158 = scmp.eq.s32.totalorder %s16, 1
      %p159 = por %p157, %p158
      %p160 = scmp.ne.s32.totalorder %s152, %s155
      %p161 = scmp.eq.s32.totalorder %s16, 0
      %p162 = por %p160, %p161
      %p163 = scmp.ne.s32.totalorder %s152, %s155
      %p164 = scmp.eq.s32.totalorder %s21, 1
      %p165 = por %p163, %p164
      %p166 = scmp.ne.s32.totalorder %s155, %s156
      %p167 = scmp.eq.s32.totalorder %s21, 0
      %p168 = por %p166, %p167
      %p169 = scmp.ne.s32.totalorder %s155, %s156
      %p170 = scmp.eq.s32.totalorder %s22, 1
      %p171 = por %p169, %p170
      %p173 = scmp.ne.s32.totalorder %s156, %s172
      %p174 = scmp.eq.s32.totalorder %s22, 0
      %p175 = por %p173, %p174
      %p176 = scmp.le.s32.totalorder 1, %s16
      %p177 = scmp.lt.s32.totalorder %s16, 3
      %p178 = pnand %p176, %p177
      %p179 = pneg %p178
      // Predicated region
      $region9: #{tpu_custom_call.1} parent=5 // pred_check
        _
      $region10: #{tpu_custom_call.1} parent=5 // pred_check_branch
        %181 = sbr.rel (%p178) target = $region12
      $region11: #{tpu_custom_call.1} parent=5 // pred_region
        %s182 = ssub.s32 %s16, 1
        // Predicated region
        $region13: #{tpu_custom_call.1} parent=11 // pred_check
          %p183 = pneg %p77
        $region14: #{tpu_custom_call.1} parent=11 // pred_check_branch
          %185 = sbr.rel (%p183) target = $region16
        $region15: #{tpu_custom_call.1} parent=11 // pred_region
          _
        $region16: #{tpu_custom_call.1} parent=11 // pred_fallthru
          _
        // Predicated region
        $region17: #{tpu_custom_call.1} parent=11 // pred_check
          %p186 = pneg %p98
        $region18: #{tpu_custom_call.1} parent=11 // pred_check_branch
          %188 = sbr.rel (%p186) target = $region20
        $region19: #{tpu_custom_call.1} parent=11 // pred_region
          _
        $region20: #{tpu_custom_call.1} parent=11 // pred_fallthru
          _
        // Predicated region
        $region21: #{tpu_custom_call.1} parent=11 // pred_check
          %p189 = pneg %p119
        $region22: #{tpu_custom_call.1} parent=11 // pred_check_branch
          %191 = sbr.rel (%p189) target = $region24
        $region23: #{tpu_custom_call.1} parent=11 // pred_region
          _
        $region24: #{tpu_custom_call.1} parent=11 // pred_fallthru
          _
        // Predicated region
        $region25: #{tpu_custom_call.1} parent=11 // pred_check
          %p192 = pneg %p140
        $region26: #{tpu_custom_call.1} parent=11 // pred_check_branch
          %194 = sbr.rel (%p192) target = $region28
        $region27: #{tpu_custom_call.1} parent=11 // pred_region
          _
        $region28: #{tpu_custom_call.1} parent=11 // pred_fallthru
          _
      $region12: #{tpu_custom_call.1} parent=5 // pred_fallthru
        _
      %p195 = scmp.lt.s32.totalorder %s16, 2
      // Predicated region
      $region29: #{tpu_custom_call.1} parent=5 // pred_check
        %p196 = pneg %p195
      $region30: #{tpu_custom_call.1} parent=5 // pred_check_branch
        %198 = sbr.rel (%p196) target = $region32
      $region31: #{tpu_custom_call.1} parent=5 // pred_region
        // Predicated region
        $region33: #{tpu_custom_call.1} parent=31 // pred_check
          %p199 = pneg %p50
        $region34: #{tpu_custom_call.1} parent=31 // pred_check_branch
          %201 = sbr.rel (%p199) target = $region36
        $region35: #{tpu_custom_call.1} parent=31 // pred_region
          %p202 = scmp.lt.s32.totalorder %s23, 1
          %s203 = scalar_select %p202, %s23, 1
          %p204 = scmp.lt.s32.totalorder %s24, 0
          %s205 = scalar_select %p204, %s24, 0
          %s206 = sadd.s32 %s205, %s203
          %s207 = smul.addr %s206, 4
          %s208 = scalar_lea.vmem %s0, %s207
        $region36: #{tpu_custom_call.1} parent=31 // pred_fallthru
          _
      $region32: #{tpu_custom_call.1} parent=5 // pred_fallthru
        _
      %p209 = scmp.le.s32.totalorder 1, %s16
      %p210 = scmp.lt.s32.totalorder %s16, 3
      %p211 = pnand %p209, %p210
      %p212 = pneg %p211
      // Predicated region
      $region37: #{tpu_custom_call.1} parent=5 // pred_check
        _
      $region38: #{tpu_custom_call.1} parent=5 // pred_check_branch
        %214 = sbr.rel (%p211) target = $region40
      $region39: #{tpu_custom_call.1} parent=5 // pred_region
        %s215 = ssub.s32 %s16, 1
        %p216 = scmp.lt.s32.totalorder %s25, 1
        %s217 = scalar_select %p216, %s25, 1
        %p218 = scmp.lt.s32.totalorder %s26, 0
        %s219 = scalar_select %p218, %s26, 0
        %s220 = sadd.s32 %s219, %s217
        %s221 = smul.addr %s220, 4
        %s222 = scalar_lea.vmem %s0, %s221
        %p223 = pneg %p56
        %p224 = pneg %p53
        %p225 = pneg %p77
        %p226 = pneg %p74
        %p227 = pneg %p98
        %p228 = pneg %p95
        %p229 = pneg %p119
        %p230 = pneg %p116
        %p231 = pneg %p140
        %p232 = pneg %p137
        %p233 = pneg %p168
        %p234 = pneg %p165
        %s235 = sand.u32 %s155, 1
        %s236 = scalar_lea.sflag [#allocation4], %s235
        %s237 = sand.u32 %s155, 1
        %s238 = smul.addr %s237, 4
        %s239 = scalar_lea.vmem [#allocation3], %s238
        %p240 = scmp.lt.s32.totalorder %s25, 1
        %s241 = scalar_select %p240, %s25, 1
        %p242 = scmp.lt.s32.totalorder %s26, 0
        %s243 = scalar_select %p242, %s26, 0
        %s244 = sadd.s32 %s243, %s241
        %s245 = smul.addr %s244, 4
        %s246 = scalar_lea.vmem %s0, %s245
        %v247 = vld [vmem:[%s246] sm:$0xf]
        %v248 = vld [vmem:[%s1] sm:$0xf]
        %v249 = vld [vmem:[#allocation2] sm:$0x1]
        %v250 = vld [vmem:[%s3] sm:$0xf]
        %v251 = vld [vmem:[%s4] sm:$0xf]
        %253 = vset.pattern.permute.xlu0 0
        %254 = vperm.xlu0 %253, %v248
        %v255 = vpop.permute.xlu0 %254
        %v257 = vmul.f32 %v247, %v255
        %vm258 = vcmask 125952
        %v259 = vsel %vm258, %v257, 0.0
        %v260 = vrot.slane %v259, 4
        %v261 = vadd.f32 %v259, %v260
        %v262 = vrot.slane %v261, 2
        %v263 = vadd.f32 %v261, %v262
        %v264 = vrot.slane %v263, 1
        %v265 = vadd.f32 %v263, %v264
        %267 = vset.pattern.permute.xlu0 0
        %268 = vperm.xlu0 %267, %v249
        %v269 = vpop.permute.xlu0 %268
        %v271 = vlaneseq
        %v272 = vshrl.u32 %v271, 7
        %v273 = vsub.s32 0, %v272
        %v274 = vrot.slane %v269, %v273
        %v275 = vadd.f32 %v265, %v274
        %v276 = vxor.u32 %v275, 2147483648
        %v277 = vmul.f32 %v276, 1.442695
        %v278 = vpow.pop %v277
        %v279 = vadd.f32 %v278, 1.0
        %v280 = vrcp.pop %v279
        %v281 = vmul.f32 1.0, %v280
        %v282 = vmul.f32 %v275, %v281
        %284 = vset.pattern.permute.xlu0 0
        %285 = vperm.xlu0 %284, %v250
        %v286 = vpop.permute.xlu0 %285
        %v288 = vmul.f32 %v286, %v282
        %v289 = vadd.f32 %v288, 0.0
        %291 = vset.pattern.permute.xlu0 0
        %292 = vperm.xlu0 %291, %v251
        %v293 = vpop.permute.xlu0 %292
        %v295 = vadd.f32 %v289, %v293
        %v296 = vxor.u32 %v295, 2147483648
        %v297 = vmul.f32 %v296, 1.442695
        %v298 = vpow.pop %v297
        %v299 = vadd.f32 %v298, 1.0
        %v300 = vrcp.pop %v299
        %v301 = vmul.f32 1.0, %v300
        %v302 = vmul.f32 %v247, %v301
        %303 = vst.msk [vmem:[%s239] sm:$0xf] %vm258, %v302
        %s304 = sand.u32 %s155, 1
        %s305 = scalar_lea.sflag [#allocation4], %s304
        %s306 = sand.u32 %s155, 1
        %s307 = smul.addr %s306, 4
        %s308 = scalar_lea.vmem [#allocation3], %s307
        // Predicated region
        $region41: #{tpu_custom_call.1} parent=39 // pred_check
          %p309 = pneg %p165
        $region42: #{tpu_custom_call.1} parent=39 // pred_check_branch
          %311 = sbr.rel (%p309) target = $region44
        $region43: #{tpu_custom_call.1} parent=39 // pred_region
          %s313 = ssub.s32 64, 64
          %314 = vsyncadd %s305, %s313
          %s315 = sadd.s32 %s26, %s25
          %s316 = smul.addr %s315, 64
          %s317 = scalar_lea.hbm %s5, %s316
          %s319 = sshll.u32 %s308, 4
          %s320 = int_to_ptr.vmem [resolvable:$true] %s319
          %322 = dma.vmem_to_hbm [thread:$0]  %s320, 64, %s317, %s305
        $region44: #{tpu_custom_call.1} parent=39 // pred_fallthru
          _
      $region40: #{tpu_custom_call.1} parent=5 // pred_fallthru
        _
      %p323 = scmp.le.s32.totalorder 2, %s16
      // Predicated region
      $region45: #{tpu_custom_call.1} parent=5 // pred_check
        %p324 = pneg %p323
      $region46: #{tpu_custom_call.1} parent=5 // pred_check_branch
        %326 = sbr.rel (%p324) target = $region48
      $region47: #{tpu_custom_call.1} parent=5 // pred_region
        %s327 = ssub.s32 %s16, 2
        // Predicated region
        $region49: #{tpu_custom_call.1} parent=47 // pred_check
          %p328 = pneg %p171
        $region50: #{tpu_custom_call.1} parent=47 // pred_check_branch
          %330 = sbr.rel (%p328) target = $region52
        $region51: #{tpu_custom_call.1} parent=47 // pred_region
          %s331 = sand.u32 %s156, 1
          %s332 = scalar_lea.sflag [#allocation4], %s331
          %s333 = sand.u32 %s156, 1
          %s334 = smul.addr %s333, 4
          %s335 = scalar_lea.vmem [#allocation3], %s334
          %336 = dma.done %s332, 64
        $region52: #{tpu_custom_call.1} parent=47 // pred_fallthru
          _
      $region48: #{tpu_custom_call.1} parent=5 // pred_fallthru
        _
    $region6: #{tpu_custom_call.1} parent=1 // loop_footer
      %s20 = sadd.s32 1, %s16
    $region7: #{tpu_custom_call.1} parent=1 // loop_footer_branch
      %15 = sbr.rel target = $region3
    $region8: #{tpu_custom_call.1} parent=1 // loop_exit
      _
    %337 = vsyncpa [#allocation4], 1
    %s338 = scalar_lea.sflag [#allocation4], 1
    %339 = vsyncpa %s338, 1

</llo_original>
